<compile_context>
chip_gen: v5e
topology: v5e:2x2
jax: 0.10.0
libtpu: 0.0.40
codegen_flags: <defaults>
</compile_context>

<pallas_src>
import jax
import jax.numpy as jnp
from jax.experimental import pallas as pl
from jax.experimental.pallas import tpu as pltpu

IN_FEATURES = 300
OUT_FEATURES = 4
DEFAULT_TB = 1024  # batch tile (rows)


def _net_kernel(x_ref, w_ref, o_ref):
    # x_ref: (TB, 300)  w_ref: (300, 4)  o_ref: (TB, 4)
    logits = jnp.dot(x_ref[...], w_ref[...], preferred_element_type=jnp.float32)
    # numerically stable softmax over the feature (last) axis == torch dim=1
    m = jnp.max(logits, axis=-1, keepdims=True)
    e = jnp.exp(logits - m)
    denom = jnp.sum(e, axis=-1, keepdims=True)
    o_ref[...] = (e * pl.reciprocal(denom, approx=True)).astype(o_ref.dtype)


def net_forward(x, w_t, *, tb=DEFAULT_TB):
    """x: (B, 300) float32, w_t: (300, 4) float32 (transposed Linear weight)."""
    B = x.shape[0]
    # Legal batch tile: either covers all of B, or is a multiple of 8 (sublane).
    if B <= tb:
        tb = B
    else:
        tb = max(8, (tb // 8) * 8)
    grid = (pl.cdiv(B, tb),)

    cost = pl.CostEstimate(
        flops=2 * B * IN_FEATURES * OUT_FEATURES,
        bytes_accessed=(B * IN_FEATURES * 4
                        + IN_FEATURES * OUT_FEATURES * 4
                        + B * OUT_FEATURES * 4),
        transcendentals=B * OUT_FEATURES,
    )

    return pl.pallas_call(
        _net_kernel,
        out_shape=jax.ShapeDtypeStruct((B, OUT_FEATURES), jnp.float32),
        grid=grid,
        in_specs=[
            pl.BlockSpec((tb, IN_FEATURES), lambda i: (i, 0)),
            pl.BlockSpec((IN_FEATURES, OUT_FEATURES), lambda i: (0, 0)),
        ],
        out_specs=pl.BlockSpec((tb, OUT_FEATURES), lambda i: (i, 0)),
        compiler_params=pltpu.CompilerParams(
            dimension_semantics=("parallel",),
        ),
        cost_estimate=cost,
    )(x, w_t)


def init_params(key):
    # nn.Linear default init: U(-1/sqrt(fan_in), 1/sqrt(fan_in)), weight (4, 300)
    bound = 1.0 / (IN_FEATURES ** 0.5)
    return jax.random.uniform(
        key, (OUT_FEATURES, IN_FEATURES), jnp.float32, minval=-bound, maxval=bound
    )


if __name__ == "__main__":
    key = jax.random.PRNGKey(0)
    k_w, k_x = jax.random.split(key)

    w = init_params(k_w)        # (4, 300) — PyTorch weight layout
    w_t = jnp.transpose(w)      # (300, 4) — kernel layout

    B = 128
    x = jax.random.normal(k_x, (B, IN_FEATURES), jnp.float32)

    # tb=64 -> grid=(2,) so the batch-tiled / pipelined path is exercised.
    out = net_forward(x, w_t, tb=64)
    out = jax.block_until_ready(out)

    # reference: softmax(x @ W^T, dim=1)
    ref = jax.nn.softmax(x @ w.T, axis=1)

    assert out.shape == (B, OUT_FEATURES)
    row_sums = jnp.sum(out, axis=1)
    assert bool(jnp.all(jnp.abs(row_sums - 1.0) < 5e-3))
    assert bool(jnp.max(jnp.abs(out - ref)) < 5e-3)

    print("KERNEL_OK")
</pallas_src>

<mosaic_0001>
module attributes {stable_mosaic.version = 11 : i64} {
  func.func @_net_kernel(%arg0: i32, %arg1: memref<64x300xf32, #tpu.memory_space<vmem>>, %arg2: memref<300x4xf32, #tpu.memory_space<vmem>>, %arg3: memref<64x4xf32, #tpu.memory_space<vmem>>) attributes {dimension_semantics = [#tpu.dimension_semantics<parallel>], iteration_bounds = array<i64: 2>, scalar_prefetch = 0 : i64, scratch_operands = 0 : i64, tpu.core_type = #tpu.core_type<tc>, window_params = [{transform_indices = @transform_0, window_bounds = array<i64: 64, 300>}, {pipeline_mode = #tpu.pipeline_mode<synchronous>, transform_indices = @transform_1, window_bounds = array<i64: 300, 4>}, {transform_indices = @transform_2, window_bounds = array<i64: 64, 4>}]} {
    %c0 = arith.constant 0 : index
    %c0_0 = arith.constant 0 : index
    %0 = vector.load %arg1[%c0, %c0_0] : memref<64x300xf32, #tpu.memory_space<vmem>>, vector<64x300xf32>
    %c0_1 = arith.constant 0 : index
    %c0_2 = arith.constant 0 : index
    %1 = vector.load %arg2[%c0_1, %c0_2] : memref<300x4xf32, #tpu.memory_space<vmem>>, vector<300x4xf32>
    %cst = arith.constant dense<0.000000e+00> : vector<64x4xf32>
    %2 = tpu.matmul %0, %1, %cst {dimension_numbers = #tpu.dot_dimension_numbers<[1], [0], [0], [1], [0, 0, 1, 1], [], []>} : vector<64x300xf32>, vector<300x4xf32>, vector<64x4xf32> -> vector<64x4xf32>
    %cst_3 = arith.constant dense<0xFF800000> : vector<64xf32>
    %3 = vector.multi_reduction <maximumf>, %2, %cst_3 [1] : vector<64x4xf32> to vector<64xf32>
    %4 = vector.shape_cast %3 : vector<64xf32> to vector<64x1xf32>
    %5 = vector.broadcast %4 : vector<64x1xf32> to vector<64x4xf32>
    %6 = arith.subf %2, %5 : vector<64x4xf32>
    %7 = math.exp %6 : vector<64x4xf32>
    %cst_4 = arith.constant dense<0.000000e+00> : vector<64xf32>
    %8 = vector.multi_reduction <add>, %7, %cst_4 [1] : vector<64x4xf32> to vector<64xf32>
    %9 = vector.shape_cast %8 : vector<64xf32> to vector<64x1xf32>
    %10 = tpu.reciprocal %9 {approx = true} : vector<64x1xf32> -> vector<64x1xf32>
    %11 = vector.broadcast %10 : vector<64x1xf32> to vector<64x4xf32>
    %12 = arith.mulf %7, %11 : vector<64x4xf32>
    %c0_5 = arith.constant 0 : index
    %c0_6 = arith.constant 0 : index
    %13 = vector.load %arg3[%c0_5, %c0_6] : memref<64x4xf32, #tpu.memory_space<vmem>>, vector<64x4xf32>
    tpu.vector_store %arg3[%c0_5, %c0_6], %12 {strides = array<i32>} : memref<64x4xf32, #tpu.memory_space<vmem>>, vector<64x4xf32>,
    return
  }
  func.func @transform_0(%arg0: i32) -> (i32, i32) {
    %c0_i32 = arith.constant 0 : i32
    %c0_i32_0 = arith.constant 0 : i32
    return %arg0, %c0_i32 : i32, i32
  }
  func.func @transform_1(%arg0: i32) -> (i32, i32) {
    %c0_i32 = arith.constant 0 : i32
    %c0_i32_0 = arith.constant 0 : i32
    %c0_i32_1 = arith.constant 0 : i32
    return %c0_i32, %c0_i32_0 : i32, i32
  }
  func.func @transform_2(%arg0: i32) -> (i32, i32) {
    %c0_i32 = arith.constant 0 : i32
    %c0_i32_0 = arith.constant 0 : i32
    return %arg0, %c0_i32 : i32, i32
  }
}

</mosaic_0001>

<llo_original>
// kernel: tpu_custom_call.1
$region0: #{tpu_custom_call.1}
  #allocation0 [shape = 'u32[]', space=smem, size = 0x4, offset = 0x4, fixed_abs, tag = 'smem constant byte address 0x4 - core index']
  #allocation1 [shape = 'u32[72,128]{1,0:T(1,128)}', space=vmem, size = 0x9000, scoped, tag = 'internal scratch']
  %s0 = inlined_call_operand.vmem [shape: f32[128,300], index: 0, kind: input, shape index: {}]
  %s1 = inlined_call_operand.vmem [shape: f32[300,4], index: 1, kind: input, shape index: {}]
  %s2 = inlined_call_operand.vmem [shape: f32[128,4], index: 2, kind: output, shape index: {}]
  %s3 = sld [smem:[#allocation0]]
  $region41: #{tpu_custom_call.1} parent=0
    _
  %s5 = ssub.s32 1, %s3
  %s6 = scalar_select 0, %s5, %s3
  loop: start=0, step=1, limit=4
  $region2: #{tpu_custom_call.1} parent=0 // loop_pre_header
    _
  $region3: #{tpu_custom_call.1} parent=0 // loop_header
    %s8 = sphi 0, %s12
    %p9 = scmp.ge.s32.totalorder %s8, 4
    %s18 = sphi 0, %s20
    %s21 = sphi 0, %s18
    %s22 = sphi 0, %s21
    %s38 = sphi 0, %s22
    %s42 = sphi 0, %s42
    %s44 = sphi 0, %s42
    %s45 = sphi 0, %s44
    %s59 = sphi 0, %s45
    %s65 = sphi 0, %s67
    %s68 = sphi 0, %s65
    %s69 = sphi 0, %s68
    %s85 = sphi 0, %s69
  $region4: #{tpu_custom_call.1} parent=0 // loop_header_branch
    %11 = sbr.rel (%p9) target = $region8
  $region5: #{tpu_custom_call.1} parent=0 // loop_body
    %s13 = ssub.s32 %s8, 1
    %s14 = ssub.s32 %s8, 2
    %s15 = sadd.s32 %s8, 1
    %s16 = ssub.s32 %s8, %s15
    %p17 = scmp.eq.s32.totalorder %s16, 0
    %s19 = sadd.s32 %s18, 1
    %s20 = scalar_select %p17, %s18, %s19
    %p23 = pneg %p17
    %p24 = scmp.eq.s32.totalorder %s8, 1
    %p25 = por %p23, %p24
    %p26 = scmp.ne.s32.totalorder %s18, %s21
    %p27 = scmp.eq.s32.totalorder %s8, 0
    %p28 = por %p26, %p27
    %p29 = scmp.ne.s32.totalorder %s18, %s21
    %p30 = scmp.eq.s32.totalorder %s13, 1
    %p31 = por %p29, %p30
    %p32 = scmp.ne.s32.totalorder %s21, %s22
    %p33 = scmp.eq.s32.totalorder %s13, 0
    %p34 = por %p32, %p33
    %p35 = scmp.ne.s32.totalorder %s21, %s22
    %p36 = scmp.eq.s32.totalorder %s14, 1
    %p37 = por %p35, %p36
    %p39 = scmp.ne.s32.totalorder %s22, %s38
    %p40 = scmp.eq.s32.totalorder %s14, 0
    %p41 = por %p39, %p40
    %s43 = sadd.s32 %s42, 1
    %p46 = scmp.eq.s32.totalorder %s8, 1
    %p47 = scmp.ne.s32.totalorder %s42, %s44
    %p48 = scmp.eq.s32.totalorder %s8, 0
    %p49 = por %p47, %p48
    %p50 = scmp.ne.s32.totalorder %s42, %s44
    %p51 = scmp.eq.s32.totalorder %s13, 1
    %p52 = por %p50, %p51
    %p53 = scmp.ne.s32.totalorder %s44, %s45
    %p54 = scmp.eq.s32.totalorder %s13, 0
    %p55 = por %p53, %p54
    %p56 = scmp.ne.s32.totalorder %s44, %s45
    %p57 = scmp.eq.s32.totalorder %s14, 1
    %p58 = por %p56, %p57
    %p60 = scmp.ne.s32.totalorder %s45, %s59
    %p61 = scmp.eq.s32.totalorder %s14, 0
    %p62 = por %p60, %p61
    %s63 = ssub.s32 %s8, %s15
    %p64 = scmp.eq.s32.totalorder %s63, 0
    %s66 = sadd.s32 %s65, 1
    %s67 = scalar_select %p64, %s65, %s66
    %p70 = pneg %p64
    %p71 = scmp.eq.s32.totalorder %s8, 1
    %p72 = por %p70, %p71
    %p73 = scmp.ne.s32.totalorder %s65, %s68
    %p74 = scmp.eq.s32.totalorder %s8, 0
    %p75 = por %p73, %p74
    %p76 = scmp.ne.s32.totalorder %s65, %s68
    %p77 = scmp.eq.s32.totalorder %s13, 1
    %p78 = por %p76, %p77
    %p79 = scmp.ne.s32.totalorder %s68, %s69
    %p80 = scmp.eq.s32.totalorder %s13, 0
    %p81 = por %p79, %p80
    %p82 = scmp.ne.s32.totalorder %s68, %s69
    %p83 = scmp.eq.s32.totalorder %s14, 1
    %p84 = por %p82, %p83
    %p86 = scmp.ne.s32.totalorder %s69, %s85
    %p87 = scmp.eq.s32.totalorder %s14, 0
    %p88 = por %p86, %p87
    %p89 = scmp.le.s32.totalorder 1, %s8
    %p90 = scmp.lt.s32.totalorder %s8, 3
    %p91 = pnand %p89, %p90
    %p92 = pneg %p91
    // Predicated region
    $region9: #{tpu_custom_call.1} parent=5 // pred_check
      _
    $region10: #{tpu_custom_call.1} parent=5 // pred_check_branch
      %94 = sbr.rel (%p91) target = $region12
    $region11: #{tpu_custom_call.1} parent=5 // pred_region
      %s95 = ssub.s32 %s8, 1
      // Predicated region
      $region13: #{tpu_custom_call.1} parent=11 // pred_check
        %p96 = pneg %p55
      $region14: #{tpu_custom_call.1} parent=11 // pred_check_branch
        %98 = sbr.rel (%p96) target = $region16
      $region15: #{tpu_custom_call.1} parent=11 // pred_region
        _
      $region16: #{tpu_custom_call.1} parent=11 // pred_fallthru
        _
    $region12: #{tpu_custom_call.1} parent=5 // pred_fallthru
      _
    %p99 = scmp.lt.s32.totalorder %s8, 2
    // Predicated region
    $region17: #{tpu_custom_call.1} parent=5 // pred_check
      %p100 = pneg %p99
    $region18: #{tpu_custom_call.1} parent=5 // pred_check_branch
      %102 = sbr.rel (%p100) target = $region20
    $region19: #{tpu_custom_call.1} parent=5 // pred_region
      // Predicated region
      $region21: #{tpu_custom_call.1} parent=19 // pred_check
        %p103 = pneg %p28
      $region22: #{tpu_custom_call.1} parent=19 // pred_check_branch
        %105 = sbr.rel (%p103) target = $region24
      $region23: #{tpu_custom_call.1} parent=19 // pred_region
        %s106 = smul.u32 8, %s8
        %p107 = scmp.lt.s32.totalorder %s106, 15
        %s108 = scalar_select %p107, %s106, 15
        %s109 = smul.addr %s108, 3
        %s110 = smul.addr %s109, 8
        %s111 = scalar_lea.vmem %s0, %s110
        %s112 = smul.u32 8, %s8
      $region24: #{tpu_custom_call.1} parent=19 // pred_fallthru
        _
    $region20: #{tpu_custom_call.1} parent=5 // pred_fallthru
      _
    %p113 = scmp.le.s32.totalorder 1, %s8
    %p114 = scmp.lt.s32.totalorder %s8, 3
    %p115 = pnand %p113, %p114
    %p116 = pneg %p115
    // Predicated region
    $region25: #{tpu_custom_call.1} parent=5 // pred_check
      _
    $region26: #{tpu_custom_call.1} parent=5 // pred_check_branch
      %118 = sbr.rel (%p115) target = $region28
    $region27: #{tpu_custom_call.1} parent=5 // pred_region
      %s119 = ssub.s32 %s8, 1
      %s120 = smul.u32 8, %s13
      %p121 = scmp.lt.s32.totalorder %s120, 15
      %s122 = scalar_select %p121, %s120, 15
      %s123 = smul.addr %s122, 3
      %s124 = smul.addr %s123, 8
      %s125 = scalar_lea.vmem %s0, %s124
      %p126 = pneg %p34
      %p127 = pneg %p31
      %p128 = pneg %p55
      %p129 = pneg %p52
      %p130 = pneg %p81
      %p131 = pneg %p78
      %s132 = smul.u32 8, %s13
      %p133 = scmp.lt.s32.totalorder %s132, 15
      %s134 = scalar_select %p133, %s132, 15
      %s135 = smul.addr %s134, 8
      %s136 = scalar_lea.vmem %s2, %s135
      %s137 = smul.u32 8, %s13
      %p138 = scmp.lt.s32.totalorder %s137, 15
      %s139 = scalar_select %p138, %s137, 15
      %s140 = smul.addr %s139, 3
      %s141 = smul.addr %s140, 8
      %s142 = scalar_lea.vmem %s0, %s141
      %s143 = smul.u32 8, %s13
      %s144 = smul.u32 8, %s13
      %p145 = scmp.lt.s32.totalorder %s144, 15
      %s146 = scalar_select %p145, %s144, 15
      %s147 = smul.addr %s146, 8
      %s148 = scalar_lea.vmem %s2, %s147
      %s149 = smul.u32 8, %s13
      %v150 = vld [vmem:[%s142] sm:$0xff]
      %v151 = vld [vmem:[%s142 + $0x8] sm:$0xff]
      %v152 = vld [vmem:[%s142 + $0x10] sm:$0xff]
      %v153 = vld [vmem:[%s142 + $0x18] sm:$0xff]
      %v154 = vld [vmem:[%s142 + $0x20] sm:$0xff]
      %v155 = vld [vmem:[%s142 + $0x28] sm:$0xff]
      %v156 = vld [vmem:[%s142 + $0x30] sm:$0xff]
      %v157 = vld [vmem:[%s142 + $0x38] sm:$0xff]
      %v158 = vld [vmem:[%s142 + $0x40] sm:$0xff]
      %v159 = vld [vmem:[%s142 + $0x48] sm:$0xff]
      %v160 = vld [vmem:[%s142 + $0x50] sm:$0xff]
      %v161 = vld [vmem:[%s142 + $0x58] sm:$0xff]
      %v162 = vld [vmem:[%s142 + $0x60] sm:$0xff]
      %v163 = vld [vmem:[%s142 + $0x68] sm:$0xff]
      %v164 = vld [vmem:[%s142 + $0x70] sm:$0xff]
      %v165 = vld [vmem:[%s142 + $0x78] sm:$0xff]
      %v166 = vld [vmem:[%s142 + $0x80] sm:$0xff]
      %v167 = vld [vmem:[%s142 + $0x88] sm:$0xff]
      %v168 = vld [vmem:[%s142 + $0x90] sm:$0xff]
      %v169 = vld [vmem:[%s142 + $0x98] sm:$0xff]
      %v170 = vld [vmem:[%s142 + $0xa0] sm:$0xff]
      %v171 = vld [vmem:[%s142 + $0xa8] sm:$0xff]
      %v172 = vld [vmem:[%s142 + $0xb0] sm:$0xff]
      %v173 = vld [vmem:[%s142 + $0xb8] sm:$0xff]
      %v174 = vld [vmem:[%s1] sm:$0xff]
      %v175 = vld [vmem:[%s1 + $0x8] sm:$0xff]
      %v176 = vld [vmem:[%s1 + $0x10] sm:$0xff]
      %v177 = vld [vmem:[%s1 + $0x18] sm:$0xff]
      %v178 = vld [vmem:[%s1 + $0x20] sm:$0xff]
      %v179 = vld [vmem:[%s1 + $0x28] sm:$0xff]
      %v180 = vld [vmem:[%s1 + $0x30] sm:$0xff]
      %v181 = vld [vmem:[%s1 + $0x38] sm:$0xff]
      %v182 = vld [vmem:[%s1 + $0x40] sm:$0xff]
      %v183 = vld [vmem:[%s1 + $0x48] sm:$0xff]
      %v184 = vld [vmem:[%s1 + $0x50] sm:$0xff]
      %v185 = vld [vmem:[%s1 + $0x58] sm:$0xff]
      %v186 = vld [vmem:[%s1 + $0x60] sm:$0xff]
      %v187 = vld [vmem:[%s1 + $0x68] sm:$0xff]
      %v188 = vld [vmem:[%s1 + $0x70] sm:$0xff]
      %v189 = vld [vmem:[%s1 + $0x78] sm:$0xff]
      %v190 = vld [vmem:[%s1 + $0x80] sm:$0xff]
      %v191 = vld [vmem:[%s1 + $0x88] sm:$0xff]
      %v192 = vld [vmem:[%s1 + $0x90] sm:$0xff]
      %v193 = vld [vmem:[%s1 + $0x98] sm:$0xff]
      %v194 = vld [vmem:[%s1 + $0xa0] sm:$0xff]
      %v195 = vld [vmem:[%s1 + $0xa8] sm:$0xff]
      %v196 = vld [vmem:[%s1 + $0xb0] sm:$0xff]
      %v197 = vld [vmem:[%s1 + $0xb8] sm:$0xff]
      %v198 = vld [vmem:[%s1 + $0xc0] sm:$0xff]
      %v199 = vld [vmem:[%s1 + $0xc8] sm:$0xff]
      %v200 = vld [vmem:[%s1 + $0xd0] sm:$0xff]
      %v201 = vld [vmem:[%s1 + $0xd8] sm:$0xff]
      %v202 = vld [vmem:[%s1 + $0xe0] sm:$0xff]
      %v203 = vld [vmem:[%s1 + $0xe8] sm:$0xff]
      %v204 = vld [vmem:[%s1 + $0xf0] sm:$0xff]
      %v205 = vld [vmem:[%s1 + $0xf8] sm:$0xff]
      %v206 = vld [vmem:[%s1 + $0x100] sm:$0xff]
      %v207 = vld [vmem:[%s1 + $0x108] sm:$0xff]
      %v208 = vld [vmem:[%s1 + $0x110] sm:$0xff]
      %v209 = vld [vmem:[%s1 + $0x118] sm:$0xff]
      %v210 = vld [vmem:[%s1 + $0x120] sm:$0xff]
      %v211 = vld [vmem:[%s1 + $0x128] sm:$0xf]
      %vm212 = vcmask 359424
      %v214 = vsel %vm212, %v152, 0
      %v217 = vsel %vm212, %v155, 0
      %v220 = vsel %vm212, %v158, 0
      %v223 = vsel %vm212, %v161, 0
      %v226 = vsel %vm212, %v164, 0
      %v229 = vsel %vm212, %v167, 0
      %v232 = vsel %vm212, %v170, 0
      %v235 = vsel %vm212, %v173, 0
      %vm237 = vcmask 1043456
      %v239 = vsel %vm237, %v211, 0
      %241 = vmatpush.msra.mxu0 %v189
      %242 = vmatpush.msra.mxu0 %v188
      %243 = vmatpush.msra.mxu0 %v187
      %244 = vmatpush.msra.mxu0 %v186
      %245 = vmatpush.msra.mxu0 %v185
      %246 = vmatpush.msra.mxu0 %v184
      %247 = vmatpush.msra.mxu0 %v183
      %248 = vmatpush.msra.mxu0 %v182
      %249 = vmatpush.msra.mxu0 %v181
      %250 = vmatpush.msra.mxu0 %v180
      %251 = vmatpush.msra.mxu0 %v179
      %252 = vmatpush.msra.mxu0 %v178
      %253 = vmatpush.msra.mxu0 %v177
      %254 = vmatpush.msra.mxu0 %v176
      %255 = vmatpush.msra.mxu0 %v175
      %256 = vmatpush.msra.mxu0 %v174
      %257 = vmatmul.f32.gmra.mxu0 %v150
      %v258 = vpop.f32.mrf.mxu0
      %v259 = vadd.f32 0.0, %v258
      %260 = vmatmul.f32.gmra.mxu0 %v153
      %v261 = vpop.f32.mrf.mxu0
      %v262 = vadd.f32 0.0, %v261
      %263 = vmatmul.f32.gmra.mxu0 %v156
      %v264 = vpop.f32.mrf.mxu0
      %v265 = vadd.f32 0.0, %v264
      %266 = vmatmul.f32.gmra.mxu0 %v159
      %v267 = vpop.f32.mrf.mxu0
      %v268 = vadd.f32 0.0, %v267
      %269 = vmatmul.f32.gmra.mxu0 %v162
      %v270 = vpop.f32.mrf.mxu0
      %v271 = vadd.f32 0.0, %v270
      %272 = vmatmul.f32.gmra.mxu0 %v165
      %v273 = vpop.f32.mrf.mxu0
      %v274 = vadd.f32 0.0, %v273
      %275 = vmatmul.f32.gmra.mxu0 %v168
      %v276 = vpop.f32.mrf.mxu0
      %v277 = vadd.f32 0.0, %v276
      %278 = vmatmul.f32.gmra.mxu0 %v171
      %v279 = vpop.f32.mrf.mxu0
      %v280 = vadd.f32 0.0, %v279
      %281 = vdwg.mxu0
      %282 = vmatpush.msra.mxu0 %v205
      %283 = vmatpush.msra.mxu0 %v204
      %284 = vmatpush.msra.mxu0 %v203
      %285 = vmatpush.msra.mxu0 %v202
      %286 = vmatpush.msra.mxu0 %v201
      %287 = vmatpush.msra.mxu0 %v200
      %288 = vmatpush.msra.mxu0 %v199
      %289 = vmatpush.msra.mxu0 %v198
      %290 = vmatpush.msra.mxu0 %v197
      %291 = vmatpush.msra.mxu0 %v196
      %292 = vmatpush.msra.mxu0 %v195
      %293 = vmatpush.msra.mxu0 %v194
      %294 = vmatpush.msra.mxu0 %v193
      %295 = vmatpush.msra.mxu0 %v192
      %296 = vmatpush.msra.mxu0 %v191
      %297 = vmatpush.msra.mxu0 %v190
      %298 = vmatmul.f32.gmra.mxu0 %v151
      %v299 = vpop.f32.mrf.mxu0
      %v300 = vadd.f32 %v259, %v299
      %301 = vmatmul.f32.gmra.mxu0 %v154
      %v302 = vpop.f32.mrf.mxu0
      %v303 = vadd.f32 %v262, %v302
      %304 = vmatmul.f32.gmra.mxu0 %v157
      %v305 = vpop.f32.mrf.mxu0
      %v306 = vadd.f32 %v265, %v305
      %307 = vmatmul.f32.gmra.mxu0 %v160
      %v308 = vpop.f32.mrf.mxu0
      %v309 = vadd.f32 %v268, %v308
      %310 = vmatmul.f32.gmra.mxu0 %v163
      %v311 = vpop.f32.mrf.mxu0
      %v312 = vadd.f32 %v271, %v311
      %313 = vmatmul.f32.gmra.mxu0 %v166
      %v314 = vpop.f32.mrf.mxu0
      %v315 = vadd.f32 %v274, %v314
      %316 = vmatmul.f32.gmra.mxu0 %v169
      %v317 = vpop.f32.mrf.mxu0
      %v318 = vadd.f32 %v277, %v317
      %319 = vmatmul.f32.gmra.mxu0 %v172
      %v320 = vpop.f32.mrf.mxu0
      %v321 = vadd.f32 %v280, %v320
      %322 = vdwg.mxu0
      %323 = vmatpush.msra.mxu0 0.0
      %324 = vmatpush.msra.mxu0 0.0
      %325 = vmatpush.msra.mxu0 0.0
      %326 = vmatpush.msra.mxu0 0.0
      %327 = vmatpush.msra.mxu0 0.0
      %328 = vmatpush.msra.mxu0 0.0
      %329 = vmatpush.msra.mxu0 0.0
      %330 = vmatpush.msra.mxu0 0.0
      %331 = vmatpush.msra.mxu0 0.0
      %332 = vmatpush.msra.mxu0 0.0
      %333 = vmatpush.msra.mxu0 %v239
      %334 = vmatpush.msra.mxu0 %v210
      %335 = vmatpush.msra.mxu0 %v209
      %336 = vmatpush.msra.mxu0 %v208
      %337 = vmatpush.msra.mxu0 %v207
      %338 = vmatpush.msra.mxu0 %v206
      %339 = vmatmul.f32.gmra.mxu0 %v214
      %v340 = vpop.f32.mrf.mxu0
      %v341 = vadd.f32 %v300, %v340
      %342 = vmatmul.f32.gmra.mxu0 %v217
      %v343 = vpop.f32.mrf.mxu0
      %v344 = vadd.f32 %v303, %v343
      %345 = vmatmul.f32.gmra.mxu0 %v220
      %v346 = vpop.f32.mrf.mxu0
      %v347 = vadd.f32 %v306, %v346
      %348 = vmatmul.f32.gmra.mxu0 %v223
      %v349 = vpop.f32.mrf.mxu0
      %v350 = vadd.f32 %v309, %v349
      %351 = vmatmul.f32.gmra.mxu0 %v226
      %v352 = vpop.f32.mrf.mxu0
      %v353 = vadd.f32 %v312, %v352
      %354 = vmatmul.f32.gmra.mxu0 %v229
      %v355 = vpop.f32.mrf.mxu0
      %v356 = vadd.f32 %v315, %v355
      %357 = vmatmul.f32.gmra.mxu0 %v232
      %v358 = vpop.f32.mrf.mxu0
      %v359 = vadd.f32 %v318, %v358
      %360 = vmatmul.f32.gmra.mxu0 %v235
      %v361 = vpop.f32.mrf.mxu0
      %v362 = vadd.f32 %v321, %v361
      %363 = vdwg.mxu0
      %vm364 = vcmask 31744
      %v365 = vsel %vm364, %v341, -inf
      %366 = vmax.xlane.f32.xlu0 %v365
      %v367 = vpop.xlane.xlu0 %366
      %v368 = vsel %vm364, %v344, -inf
      %369 = vmax.xlane.f32.xlu0 %v368
      %v370 = vpop.xlane.xlu0 %369
      %v371 = vsel %vm364, %v347, -inf
      %372 = vmax.xlane.f32.xlu0 %v371
      %v373 = vpop.xlane.xlu0 %372
      %v374 = vsel %vm364, %v350, -inf
      %375 = vmax.xlane.f32.xlu0 %v374
      %v376 = vpop.xlane.xlu0 %375
      %v377 = vsel %vm364, %v353, -inf
      %378 = vmax.xlane.f32.xlu0 %v377
      %v379 = vpop.xlane.xlu0 %378
      %v380 = vsel %vm364, %v356, -inf
      %381 = vmax.xlane.f32.xlu0 %v380
      %v382 = vpop.xlane.xlu0 %381
      %v383 = vsel %vm364, %v359, -inf
      %384 = vmax.xlane.f32.xlu0 %v383
      %v385 = vpop.xlane.xlu0 %384
      %v386 = vsel %vm364, %v362, -inf
      %387 = vmax.xlane.f32.xlu0 %v386
      %v388 = vpop.xlane.xlu0 %387
      %v389 = vsub.f32 %v341, %v367
      %v390 = vsub.f32 %v344, %v370
      %v391 = vsub.f32 %v347, %v373
      %v392 = vsub.f32 %v350, %v376
      %v393 = vsub.f32 %v353, %v379
      %v394 = vsub.f32 %v356, %v382
      %v395 = vsub.f32 %v359, %v385
      %v396 = vsub.f32 %v362, %v388
      %v397 = vmul.f32 %v389, 1.442695
      %v398 = vpow.pop %v397
      %v399 = vmul.f32 %v390, 1.442695
      %v400 = vpow.pop %v399
      %v401 = vmul.f32 %v391, 1.442695
      %v402 = vpow.pop %v401
      %v403 = vmul.f32 %v392, 1.442695
      %v404 = vpow.pop %v403
      %v405 = vmul.f32 %v393, 1.442695
      %v406 = vpow.pop %v405
      %v407 = vmul.f32 %v394, 1.442695
      %v408 = vpow.pop %v407
      %v409 = vmul.f32 %v395, 1.442695
      %v410 = vpow.pop %v409
      %v411 = vmul.f32 %v396, 1.442695
      %v412 = vpow.pop %v411
      %v413 = vsel %vm364, %v398, 0.0
      %414 = vadd.xlane.f32.xlu0 %v413
      %v415 = vpop.xlane.xlu0 %414
      %v416 = vsel %vm364, %v400, 0.0
      %417 = vadd.xlane.f32.xlu0 %v416
      %v418 = vpop.xlane.xlu0 %417
      %v419 = vsel %vm364, %v402, 0.0
      %420 = vadd.xlane.f32.xlu0 %v419
      %v421 = vpop.xlane.xlu0 %420
      %v422 = vsel %vm364, %v404, 0.0
      %423 = vadd.xlane.f32.xlu0 %v422
      %v424 = vpop.xlane.xlu0 %423
      %v425 = vsel %vm364, %v406, 0.0
      %426 = vadd.xlane.f32.xlu0 %v425
      %v427 = vpop.xlane.xlu0 %426
      %v428 = vsel %vm364, %v408, 0.0
      %429 = vadd.xlane.f32.xlu0 %v428
      %v430 = vpop.xlane.xlu0 %429
      %v431 = vsel %vm364, %v410, 0.0
      %432 = vadd.xlane.f32.xlu0 %v431
      %v433 = vpop.xlane.xlu0 %432
      %v434 = vsel %vm364, %v412, 0.0
      %435 = vadd.xlane.f32.xlu0 %v434
      %v436 = vpop.xlane.xlu0 %435
      %v437 = vrcp.pop %v415
      %v438 = vrcp.pop %v418
      %v439 = vrcp.pop %v421
      %v440 = vrcp.pop %v424
      %v441 = vrcp.pop %v427
      %v442 = vrcp.pop %v430
      %v443 = vrcp.pop %v433
      %v444 = vrcp.pop %v436
      %v445 = vmul.f32 %v398, %v437
      %v446 = vmul.f32 %v400, %v438
      %v447 = vmul.f32 %v402, %v439
      %v448 = vmul.f32 %v404, %v440
      %v449 = vmul.f32 %v406, %v441
      %v450 = vmul.f32 %v408, %v442
      %v451 = vmul.f32 %v410, %v443
      %v452 = vmul.f32 %v412, %v444
      %453 = vst.msk [vmem:[%s148] sm:$0xff] %vm364, %v445
      %454 = vst.msk [vmem:[%s148 + $0x8] sm:$0xff] %vm364, %v446
      %455 = vst.msk [vmem:[%s148 + $0x10] sm:$0xff] %vm364, %v447
      %456 = vst.msk [vmem:[%s148 + $0x18] sm:$0xff] %vm364, %v448
      %457 = vst.msk [vmem:[%s148 + $0x20] sm:$0xff] %vm364, %v449
      %458 = vst.msk [vmem:[%s148 + $0x28] sm:$0xff] %vm364, %v450
      %459 = vst.msk [vmem:[%s148 + $0x30] sm:$0xff] %vm364, %v451
      %460 = vst.msk [vmem:[%s148 + $0x38] sm:$0xff] %vm364, %v452
      %s461 = smul.u32 8, %s13
      %p462 = scmp.lt.s32.totalorder %s461, 15
      %s463 = scalar_select %p462, %s461, 15
      %s464 = smul.addr %s463, 8
      %s465 = scalar_lea.vmem %s2, %s464
      // Predicated region
      $region29: #{tpu_custom_call.1} parent=27 // pred_check
        %p466 = pneg %p78
      $region30: #{tpu_custom_call.1} parent=27 // pred_check_branch
        %468 = sbr.rel (%p466) target = $region32
      $region31: #{tpu_custom_call.1} parent=27 // pred_region
        %s469 = smul.u32 8, %s13
      $region32: #{tpu_custom_call.1} parent=27 // pred_fallthru
        _
    $region28: #{tpu_custom_call.1} parent=5 // pred_fallthru
      _
    %p470 = scmp.le.s32.totalorder 2, %s8
    // Predicated region
    $region33: #{tpu_custom_call.1} parent=5 // pred_check
      %p471 = pneg %p470
    $region34: #{tpu_custom_call.1} parent=5 // pred_check_branch
      %473 = sbr.rel (%p471) target = $region36
    $region35: #{tpu_custom_call.1} parent=5 // pred_region
      %s474 = ssub.s32 %s8, 2
      // Predicated region
      $region37: #{tpu_custom_call.1} parent=35 // pred_check
        %p475 = pneg %p84
      $region38: #{tpu_custom_call.1} parent=35 // pred_check_branch
        %477 = sbr.rel (%p475) target = $region40
      $region39: #{tpu_custom_call.1} parent=35 // pred_region
        %s478 = smul.u32 8, %s14
        %p479 = scmp.lt.s32.totalorder %s478, 15
        %s480 = scalar_select %p479, %s478, 15
        %s481 = smul.addr %s480, 8
        %s482 = scalar_lea.vmem %s2, %s481
      $region40: #{tpu_custom_call.1} parent=35 // pred_fallthru
        _
    $region36: #{tpu_custom_call.1} parent=5 // pred_fallthru
      _
  $region6: #{tpu_custom_call.1} parent=0 // loop_footer
    %s12 = sadd.s32 1, %s8
  $region7: #{tpu_custom_call.1} parent=0 // loop_footer_branch
    %7 = sbr.rel target = $region3
  $region8: #{tpu_custom_call.1} parent=0 // loop_exit
    _

</llo_original>
